<compile_context>
chip_gen: v6e
topology: v6e:2x2x1
jax: 0.10.0
libtpu: 0.0.40
codegen_flags: <defaults>
</compile_context>

<pallas_src>
import functools

import jax
import jax.numpy as jnp
from jax.experimental import pallas as pl
from jax.experimental.pallas import tpu as pltpu

_NEG_BIG = -1e30  # logit bias for padded action lanes (exp underflows to 0)
_LANE = 128
_SUB = 8


def _round_up(x, m):
    return ((x + m - 1) // m) * m


def mlp_policy_kernel(x_ref, w1_ref, b1_ref, w2_ref, b2_ref, o_ref):
    # fc1 + tanh   (x: (TB, S), w1: (S, Hp))
    x = x_ref[...]
    h = jnp.dot(x, w1_ref[...], preferred_element_type=jnp.float32) + b1_ref[...]
    h = jnp.tanh(h)  # padded hidden lanes: tanh(0) == 0
    # fc2          (h: (TB, Hp), w2: (Hp, Ac))  -- lane-dense compute width
    logits = jnp.dot(h, w2_ref[...], preferred_element_type=jnp.float32) + b2_ref[...]
    # Softmax over the (padded, lane-dense) action axis; padded lanes carry a
    # -1e30 bias so their exp is exactly 0 and does not touch the denominator.
    m = jnp.max(logits, axis=-1, keepdims=True)
    e = jnp.exp(logits - m)
    denom = jnp.sum(e, axis=-1, keepdims=True)
    probs = e / denom  # exact divide: rows sum to 1 to f32 accuracy
    # Store only the narrow output window (A padded to 8 lanes, not 128) to
    # cut HBM output bytes ~16x; the wrapper slices [:B, :A].
    o_ref[...] = probs[:, : o_ref.shape[-1]].astype(o_ref.dtype)


def prepare_params(w1, b1, w2, b2):
    """Pad/transposed weight prep.  Run ONCE per weight update, not per call.

    w1: (H, S), b1: (H,), w2: (A, H), b2: (A,)   (torch nn.Linear layout)
    """
    H, S = w1.shape
    A = w2.shape[0]
    H_pad = _round_up(H, _LANE)
    A_cpad = _round_up(A, _LANE)  # lane-dense width used inside the kernel

    w1_t = jnp.zeros((S, H_pad), jnp.float32).at[:, :H].set(w1.T)
    b1_p = jnp.zeros((1, H_pad), jnp.float32).at[:, :H].set(b1)
    w2_t = jnp.zeros((H_pad, A_cpad), jnp.float32).at[:H, :A].set(w2.T)
    b2_p = jnp.full((1, A_cpad), _NEG_BIG, jnp.float32).at[:, :A].set(b2)
    return w1_t, b1_p, w2_t, b2_p


@functools.partial(jax.jit, static_argnames=("action_size", "block_b"))
def mlp_policy(state, w1_t, b1_p, w2_t, b2_p, *, action_size, block_b=2048):
    """state: (B, S) f32; padded params from prepare_params().
    Returns softmax probabilities (B, action_size)."""
    B, S = state.shape
    H_pad = w1_t.shape[1]
    A_cpad = w2_t.shape[1]
    A_out = _round_up(action_size, _SUB)  # narrow HBM output (e.g. 4 -> 8)

    # --- batch tiling: TB multiple of 8, capped by block_b ---
    TB = min(block_b, _round_up(B, _SUB))
    TB = _round_up(TB, _SUB)
    # v7x megacore: guarantee >= 2 grid steps so the "parallel" batch axis
    # actually splits across both TensorCores (harmless on v5e/v6e).
    if _round_up(B, TB) // TB < 2 and TB > _SUB:
        TB = _round_up(-(-B // 2), _SUB)
    B_pad = _round_up(B, TB)

    x = state
    if B_pad != B:
        x = jnp.zeros((B_pad, S), state.dtype).at[:B].set(state)

    grid = (B_pad // TB,)

    # Advisory cost estimate for XLA scheduling around the custom call.
    flops = 2 * B_pad * (S * H_pad + H_pad * A_cpad)
    transcendentals = B_pad * (H_pad + A_cpad)  # tanh + exp
    bytes_accessed = 4 * (
        B_pad * S + B_pad * A_out + S * H_pad + H_pad * A_cpad + H_pad + A_cpad
    )

    out = pl.pallas_call(
        mlp_policy_kernel,
        out_shape=jax.ShapeDtypeStruct((B_pad, A_out), jnp.float32),
        grid_spec=pltpu.PrefetchScalarGridSpec(
            num_scalar_prefetch=0,
            grid=grid,
            in_specs=[
                pl.BlockSpec((TB, S), lambda i: (i, 0)),         # x tile (pipelined)
                pl.BlockSpec((S, H_pad), lambda i: (0, 0)),      # w1 (VMEM-resident)
                pl.BlockSpec((1, H_pad), lambda i: (0, 0)),      # b1 (VMEM-resident)
                pl.BlockSpec((H_pad, A_cpad), lambda i: (0, 0)), # w2 (VMEM-resident)
                pl.BlockSpec((1, A_cpad), lambda i: (0, 0)),     # b2 (VMEM-resident)
            ],
            # Last dim == full array dim (A_out), so the (8,128) rule is satisfied.
            out_specs=pl.BlockSpec((TB, A_out), lambda i: (i, 0)),
        ),
        compiler_params=pltpu.CompilerParams(
            dimension_semantics=("parallel",),   # shard batch grid across TCs (v7x)
            vmem_limit_bytes=32 * 1024 * 1024,   # headroom for large TB on v5e
        ),
        cost_estimate=pl.CostEstimate(
            flops=flops,
            transcendentals=transcendentals,
            bytes_accessed=bytes_accessed,
        ),
    )(x, w1_t, b1_p, w2_t, b2_p)

    return out[:B, :action_size]


def init_linear_params(key, in_features, out_features):
    # Mirror torch.nn.Linear default init: U(-1/sqrt(fan_in), 1/sqrt(fan_in))
    kw, kb = jax.random.split(key)
    bound = 1.0 / jnp.sqrt(jnp.float32(in_features))
    w = jax.random.uniform(kw, (out_features, in_features), jnp.float32, -bound, bound)
    b = jax.random.uniform(kb, (out_features,), jnp.float32, -bound, bound)
    return w, b


if __name__ == "__main__":
    state_size = 32
    action_size = 4
    fc1_units = 20
    batch = 64  # small, but exercises the multi-step (2-core) grid path

    key = jax.random.PRNGKey(0)
    k_x, k_fc1, k_fc2 = jax.random.split(key, 3)

    state = jax.random.normal(k_x, (batch, state_size), jnp.float32)
    w1, b1 = init_linear_params(k_fc1, state_size, fc1_units)
    w2, b2 = init_linear_params(k_fc2, fc1_units, action_size)

    # Weight prep is hoisted out of the per-call path (done once per update).
    padded = prepare_params(w1, b1, w2, b2)
    padded = jax.block_until_ready(padded)

    out = mlp_policy(state, *padded, action_size=action_size)
    out = jax.block_until_ready(out)

    # Sanity check against plain-JAX reference (exact softmax divide -> tight tol).
    ref_h = jnp.tanh(state @ w1.T + b1)
    ref = jax.nn.softmax(ref_h @ w2.T + b2, axis=1)
    assert out.shape == (batch, action_size), f"bad shape {out.shape}"
    assert jnp.allclose(out, ref, atol=2e-5, rtol=2e-5), "mismatch vs reference"
    assert jnp.allclose(jnp.sum(out, axis=1), 1.0, atol=1e-5), "softmax rows must sum to ~1"

    print("KERNEL_OK")
</pallas_src>

<mosaic_0001>
module attributes {stable_mosaic.version = 11 : i64} {
  func.func @mlp_policy_kernel(%arg0: i32, %arg1: memref<32x32xf32, #tpu.memory_space<vmem>>, %arg2: memref<32x128xf32, #tpu.memory_space<vmem>>, %arg3: memref<1x128xf32, #tpu.memory_space<vmem>>, %arg4: memref<128x128xf32, #tpu.memory_space<vmem>>, %arg5: memref<1x128xf32, #tpu.memory_space<vmem>>, %arg6: memref<32x8xf32, #tpu.memory_space<vmem>>) attributes {dimension_semantics = [#tpu.dimension_semantics<parallel>], iteration_bounds = array<i64: 2>, scalar_prefetch = 0 : i64, scratch_operands = 0 : i64, tpu.core_type = #tpu.core_type<tc>, window_params = [{transform_indices = @transform_0, window_bounds = array<i64: 32, 32>}, {pipeline_mode = #tpu.pipeline_mode<synchronous>, transform_indices = @transform_1, window_bounds = array<i64: 32, 128>}, {pipeline_mode = #tpu.pipeline_mode<synchronous>, transform_indices = @transform_2, window_bounds = array<i64: 1, 128>}, {pipeline_mode = #tpu.pipeline_mode<synchronous>, transform_indices = @transform_3, window_bounds = array<i64: 128, 128>}, {pipeline_mode = #tpu.pipeline_mode<synchronous>, transform_indices = @transform_4, window_bounds = array<i64: 1, 128>}, {transform_indices = @transform_5, window_bounds = array<i64: 32, 8>}]} {
    %c0 = arith.constant 0 : index
    %c0_0 = arith.constant 0 : index
    %0 = vector.load %arg1[%c0, %c0_0] : memref<32x32xf32, #tpu.memory_space<vmem>>, vector<32x32xf32>
    %c0_1 = arith.constant 0 : index
    %c0_2 = arith.constant 0 : index
    %1 = vector.load %arg2[%c0_1, %c0_2] : memref<32x128xf32, #tpu.memory_space<vmem>>, vector<32x128xf32>
    %cst = arith.constant dense<0.000000e+00> : vector<32x128xf32>
    %2 = tpu.matmul %0, %1, %cst {dimension_numbers = #tpu.dot_dimension_numbers<[1], [0], [0], [1], [0, 0, 1, 1], [], []>} : vector<32x32xf32>, vector<32x128xf32>, vector<32x128xf32> -> vector<32x128xf32>
    %c0_3 = arith.constant 0 : index
    %c0_4 = arith.constant 0 : index
    %3 = vector.load %arg3[%c0_3, %c0_4] : memref<1x128xf32, #tpu.memory_space<vmem>>, vector<1x128xf32>
    %4 = vector.broadcast %3 : vector<1x128xf32> to vector<32x128xf32>
    %5 = arith.addf %2, %4 : vector<32x128xf32>
    %6 = math.tanh %5 : vector<32x128xf32>
    %c0_5 = arith.constant 0 : index
    %c0_6 = arith.constant 0 : index
    %7 = vector.load %arg4[%c0_5, %c0_6] : memref<128x128xf32, #tpu.memory_space<vmem>>, vector<128x128xf32>
    %cst_7 = arith.constant dense<0.000000e+00> : vector<32x128xf32>
    %8 = tpu.matmul %6, %7, %cst_7 {dimension_numbers = #tpu.dot_dimension_numbers<[1], [0], [0], [1], [0, 0, 1, 1], [], []>} : vector<32x128xf32>, vector<128x128xf32>, vector<32x128xf32> -> vector<32x128xf32>
    %c0_8 = arith.constant 0 : index
    %c0_9 = arith.constant 0 : index
    %9 = vector.load %arg5[%c0_8, %c0_9] : memref<1x128xf32, #tpu.memory_space<vmem>>, vector<1x128xf32>
    %10 = vector.broadcast %9 : vector<1x128xf32> to vector<32x128xf32>
    %11 = arith.addf %8, %10 : vector<32x128xf32>
    %cst_10 = arith.constant dense<0xFF800000> : vector<32xf32>
    %12 = vector.multi_reduction <maximumf>, %11, %cst_10 [1] : vector<32x128xf32> to vector<32xf32>
    %13 = vector.shape_cast %12 : vector<32xf32> to vector<32x1xf32>
    %14 = vector.broadcast %13 : vector<32x1xf32> to vector<32x128xf32>
    %15 = arith.subf %11, %14 : vector<32x128xf32>
    %16 = math.exp %15 : vector<32x128xf32>
    %cst_11 = arith.constant dense<0.000000e+00> : vector<32xf32>
    %17 = vector.multi_reduction <add>, %16, %cst_11 [1] : vector<32x128xf32> to vector<32xf32>
    %18 = vector.shape_cast %17 : vector<32xf32> to vector<32x1xf32>
    %19 = vector.broadcast %18 : vector<32x1xf32> to vector<32x128xf32>
    %20 = arith.divf %16, %19 : vector<32x128xf32>
    %21 = vector.extract_strided_slice %20 {offsets = [0, 0], sizes = [32, 8], strides = [1, 1]} : vector<32x128xf32> to vector<32x8xf32>
    %c0_12 = arith.constant 0 : index
    %c0_13 = arith.constant 0 : index
    %22 = vector.load %arg6[%c0_12, %c0_13] : memref<32x8xf32, #tpu.memory_space<vmem>>, vector<32x8xf32>
    tpu.vector_store %arg6[%c0_12, %c0_13], %21 {strides = array<i32>} : memref<32x8xf32, #tpu.memory_space<vmem>>, vector<32x8xf32>,
    return
  }
  func.func @transform_0(%arg0: i32) -> (i32, i32) {
    %c0_i32 = arith.constant 0 : i32
    %c0_i32_0 = arith.constant 0 : i32
    return %arg0, %c0_i32 : i32, i32
  }
  func.func @transform_1(%arg0: i32) -> (i32, i32) {
    %c0_i32 = arith.constant 0 : i32
    %c0_i32_0 = arith.constant 0 : i32
    %c0_i32_1 = arith.constant 0 : i32
    return %c0_i32, %c0_i32_0 : i32, i32
  }
  func.func @transform_2(%arg0: i32) -> (i32, i32) {
    %c0_i32 = arith.constant 0 : i32
    %c0_i32_0 = arith.constant 0 : i32
    %c0_i32_1 = arith.constant 0 : i32
    return %c0_i32, %c0_i32_0 : i32, i32
  }
  func.func @transform_3(%arg0: i32) -> (i32, i32) {
    %c0_i32 = arith.constant 0 : i32
    %c0_i32_0 = arith.constant 0 : i32
    %c0_i32_1 = arith.constant 0 : i32
    return %c0_i32, %c0_i32_0 : i32, i32
  }
  func.func @transform_4(%arg0: i32) -> (i32, i32) {
    %c0_i32 = arith.constant 0 : i32
    %c0_i32_0 = arith.constant 0 : i32
    %c0_i32_1 = arith.constant 0 : i32
    return %c0_i32, %c0_i32_0 : i32, i32
  }
  func.func @transform_5(%arg0: i32) -> (i32, i32) {
    %c0_i32 = arith.constant 0 : i32
    %c0_i32_0 = arith.constant 0 : i32
    return %arg0, %c0_i32 : i32, i32
  }
}

</mosaic_0001>

<llo_original>
// kernel: mlp_policy.1
$region0: #{mlp_policy.1}
  #allocation0 [shape = 'u32[]', space=smem, size = 0x4, offset = 0x4, fixed_abs, tag = 'smem constant byte address 0x4 - core index']
  #allocation1 [shape = 'u32[144,128]{1,0:T(1,128)}', space=vmem, size = 0x12000, scoped, tag = 'internal scratch']
  %s0 = inlined_call_operand.vmem [shape: f32[64,32], index: 0, kind: input, shape index: {}]
  %s1 = inlined_call_operand.vmem [shape: f32[32,128], index: 1, kind: input, shape index: {}]
  %s2 = inlined_call_operand.vmem [shape: f32[1,128], index: 2, kind: input, shape index: {}]
  %s3 = inlined_call_operand.hbm [shape: f32[128,128], index: 3, kind: input, shape index: {}]
  %s4 = inlined_call_operand.vmem [shape: f32[1,128], index: 4, kind: input, shape index: {}]
  %s5 = inlined_call_operand.vmem [shape: f32[64,8], index: 5, kind: output, shape index: {}]
  %s6 = sld [smem:[#allocation0]]
  $region57: #{mlp_policy.1} parent=0
    _
  %s8 = ssub.s32 1, %s6
  %s9 = scalar_select 0, %s8, %s6
  $region1: #{mlp_policy.1} parent=0
    #allocation2 [shape = 'u8[65536]{0}', space=vmem, size = 0x10000, scoped, tag = 'input window, operand 3, single buffered']
    #allocation3 [shape = 's32[2]{0}', space=sflag, size = 0x8, scoped, tag = 'scoped memory for mlp_policy.1']
    %10 = vsyncpa [#allocation3], 0
    loop: start=0, step=1, limit=4
    $region2: #{mlp_policy.1} parent=1 // loop_pre_header
      _
    $region3: #{mlp_policy.1} parent=1 // loop_header
      %s12 = sphi 0, %s16
      %p13 = scmp.ge.s32.totalorder %s12, 4
      %s22 = sphi 0, %s24
      %s25 = sphi 0, %s22
      %s26 = sphi 0, %s25
      %s42 = sphi 0, %s26
      %s46 = sphi 0, %s46
      %s48 = sphi 0, %s46
      %s49 = sphi 0, %s48
      %s63 = sphi 0, %s49
      %s67 = sphi 0, %s67
      %s69 = sphi 0, %s67
      %s70 = sphi 0, %s69
      %s84 = sphi 0, %s70
      %s88 = sphi 0, %s88
      %s90 = sphi 0, %s88
      %s91 = sphi 0, %s90
      %s105 = sphi 0, %s91
      %s109 = sphi 0, %s109
      %s111 = sphi 0, %s109
      %s112 = sphi 0, %s111
      %s126 = sphi 0, %s112
      %s132 = sphi 0, %s134
      %s135 = sphi 0, %s132
      %s136 = sphi 0, %s135
      %s152 = sphi 0, %s136
    $region4: #{mlp_policy.1} parent=1 // loop_header_branch
      %15 = sbr.rel (%p13) target = $region8
    $region5: #{mlp_policy.1} parent=1 // loop_body
      %s17 = ssub.s32 %s12, 1
      %s18 = ssub.s32 %s12, 2
      %s19 = sadd.s32 %s12, 1
      %s20 = ssub.s32 %s12, %s19
      %p21 = scmp.eq.s32.totalorder %s20, 0
      %s23 = sadd.s32 %s22, 1
      %s24 = scalar_select %p21, %s22, %s23
      %p27 = pneg %p21
      %p28 = scmp.eq.s32.totalorder %s12, 1
      %p29 = por %p27, %p28
      %p30 = scmp.ne.s32.totalorder %s22, %s25
      %p31 = scmp.eq.s32.totalorder %s12, 0
      %p32 = por %p30, %p31
      %p33 = scmp.ne.s32.totalorder %s22, %s25
      %p34 = scmp.eq.s32.totalorder %s17, 1
      %p35 = por %p33, %p34
      %p36 = scmp.ne.s32.totalorder %s25, %s26
      %p37 = scmp.eq.s32.totalorder %s17, 0
      %p38 = por %p36, %p37
      %p39 = scmp.ne.s32.totalorder %s25, %s26
      %p40 = scmp.eq.s32.totalorder %s18, 1
      %p41 = por %p39, %p40
      %p43 = scmp.ne.s32.totalorder %s26, %s42
      %p44 = scmp.eq.s32.totalorder %s18, 0
      %p45 = por %p43, %p44
      %s47 = sadd.s32 %s46, 1
      %p50 = scmp.eq.s32.totalorder %s12, 1
      %p51 = scmp.ne.s32.totalorder %s46, %s48
      %p52 = scmp.eq.s32.totalorder %s12, 0
      %p53 = por %p51, %p52
      %p54 = scmp.ne.s32.totalorder %s46, %s48
      %p55 = scmp.eq.s32.totalorder %s17, 1
      %p56 = por %p54, %p55
      %p57 = scmp.ne.s32.totalorder %s48, %s49
      %p58 = scmp.eq.s32.totalorder %s17, 0
      %p59 = por %p57, %p58
      %p60 = scmp.ne.s32.totalorder %s48, %s49
      %p61 = scmp.eq.s32.totalorder %s18, 1
      %p62 = por %p60, %p61
      %p64 = scmp.ne.s32.totalorder %s49, %s63
      %p65 = scmp.eq.s32.totalorder %s18, 0
      %p66 = por %p64, %p65
      %s68 = sadd.s32 %s67, 1
      %p71 = scmp.eq.s32.totalorder %s12, 1
      %p72 = scmp.ne.s32.totalorder %s67, %s69
      %p73 = scmp.eq.s32.totalorder %s12, 0
      %p74 = por %p72, %p73
      %p75 = scmp.ne.s32.totalorder %s67, %s69
      %p76 = scmp.eq.s32.totalorder %s17, 1
      %p77 = por %p75, %p76
      %p78 = scmp.ne.s32.totalorder %s69, %s70
      %p79 = scmp.eq.s32.totalorder %s17, 0
      %p80 = por %p78, %p79
      %p81 = scmp.ne.s32.totalorder %s69, %s70
      %p82 = scmp.eq.s32.totalorder %s18, 1
      %p83 = por %p81, %p82
      %p85 = scmp.ne.s32.totalorder %s70, %s84
      %p86 = scmp.eq.s32.totalorder %s18, 0
      %p87 = por %p85, %p86
      %s89 = sadd.s32 %s88, 1
      %p92 = scmp.eq.s32.totalorder %s12, 1
      %p93 = scmp.ne.s32.totalorder %s88, %s90
      %p94 = scmp.eq.s32.totalorder %s12, 0
      %p95 = por %p93, %p94
      %p96 = scmp.ne.s32.totalorder %s88, %s90
      %p97 = scmp.eq.s32.totalorder %s17, 1
      %p98 = por %p96, %p97
      %p99 = scmp.ne.s32.totalorder %s90, %s91
      %p100 = scmp.eq.s32.totalorder %s17, 0
      %p101 = por %p99, %p100
      %p102 = scmp.ne.s32.totalorder %s90, %s91
      %p103 = scmp.eq.s32.totalorder %s18, 1
      %p104 = por %p102, %p103
      %p106 = scmp.ne.s32.totalorder %s91, %s105
      %p107 = scmp.eq.s32.totalorder %s18, 0
      %p108 = por %p106, %p107
      %s110 = sadd.s32 %s109, 1
      %p113 = scmp.eq.s32.totalorder %s12, 1
      %p114 = scmp.ne.s32.totalorder %s109, %s111
      %p115 = scmp.eq.s32.totalorder %s12, 0
      %p116 = por %p114, %p115
      %p117 = scmp.ne.s32.totalorder %s109, %s111
      %p118 = scmp.eq.s32.totalorder %s17, 1
      %p119 = por %p117, %p118
      %p120 = scmp.ne.s32.totalorder %s111, %s112
      %p121 = scmp.eq.s32.totalorder %s17, 0
      %p122 = por %p120, %p121
      %p123 = scmp.ne.s32.totalorder %s111, %s112
      %p124 = scmp.eq.s32.totalorder %s18, 1
      %p125 = por %p123, %p124
      %p127 = scmp.ne.s32.totalorder %s112, %s126
      %p128 = scmp.eq.s32.totalorder %s18, 0
      %p129 = por %p127, %p128
      %s130 = ssub.s32 %s12, %s19
      %p131 = scmp.eq.s32.totalorder %s130, 0
      %s133 = sadd.s32 %s132, 1
      %s134 = scalar_select %p131, %s132, %s133
      %p137 = pneg %p131
      %p138 = scmp.eq.s32.totalorder %s12, 1
      %p139 = por %p137, %p138
      %p140 = scmp.ne.s32.totalorder %s132, %s135
      %p141 = scmp.eq.s32.totalorder %s12, 0
      %p142 = por %p140, %p141
      %p143 = scmp.ne.s32.totalorder %s132, %s135
      %p144 = scmp.eq.s32.totalorder %s17, 1
      %p145 = por %p143, %p144
      %p146 = scmp.ne.s32.totalorder %s135, %s136
      %p147 = scmp.eq.s32.totalorder %s17, 0
      %p148 = por %p146, %p147
      %p149 = scmp.ne.s32.totalorder %s135, %s136
      %p150 = scmp.eq.s32.totalorder %s18, 1
      %p151 = por %p149, %p150
      %p153 = scmp.ne.s32.totalorder %s136, %s152
      %p154 = scmp.eq.s32.totalorder %s18, 0
      %p155 = por %p153, %p154
      %p156 = scmp.le.s32.totalorder 1, %s12
      %p157 = scmp.lt.s32.totalorder %s12, 3
      %p158 = pnand %p156, %p157
      %p159 = pneg %p158
      // Predicated region
      $region9: #{mlp_policy.1} parent=5 // pred_check
        _
      $region10: #{mlp_policy.1} parent=5 // pred_check_branch
        %161 = sbr.rel (%p158) target = $region12
      $region11: #{mlp_policy.1} parent=5 // pred_region
        %s162 = ssub.s32 %s12, 1
        // Predicated region
        $region13: #{mlp_policy.1} parent=11 // pred_check
          %p163 = pneg %p59
        $region14: #{mlp_policy.1} parent=11 // pred_check_branch
          %165 = sbr.rel (%p163) target = $region16
        $region15: #{mlp_policy.1} parent=11 // pred_region
          _
        $region16: #{mlp_policy.1} parent=11 // pred_fallthru
          _
        // Predicated region
        $region17: #{mlp_policy.1} parent=11 // pred_check
          %p166 = pneg %p80
        $region18: #{mlp_policy.1} parent=11 // pred_check_branch
          %168 = sbr.rel (%p166) target = $region20
        $region19: #{mlp_policy.1} parent=11 // pred_region
          _
        $region20: #{mlp_policy.1} parent=11 // pred_fallthru
          _
        // Predicated region
        $region21: #{mlp_policy.1} parent=11 // pred_check
          %p169 = pneg %p101
        $region22: #{mlp_policy.1} parent=11 // pred_check_branch
          %171 = sbr.rel (%p169) target = $region24
        $region23: #{mlp_policy.1} parent=11 // pred_region
          %s173 = ssub.s32 2048, 2048
          %174 = vsyncadd [#allocation3], %s173
          %s175 = sshll.u32 [#allocation2], 4
          %s176 = int_to_ptr.vmem [resolvable:$true] %s175
          %181 = dma.hbm_to_vmem [thread:$0]  %s3, 2048, %s176, [#allocation3], 128, 128, 8
        $region24: #{mlp_policy.1} parent=11 // pred_fallthru
          _
        // Predicated region
        $region25: #{mlp_policy.1} parent=11 // pred_check
          %p182 = pneg %p122
        $region26: #{mlp_policy.1} parent=11 // pred_check_branch
          %184 = sbr.rel (%p182) target = $region28
        $region27: #{mlp_policy.1} parent=11 // pred_region
          _
        $region28: #{mlp_policy.1} parent=11 // pred_fallthru
          _
      $region12: #{mlp_policy.1} parent=5 // pred_fallthru
        _
      %p185 = scmp.lt.s32.totalorder %s12, 2
      // Predicated region
      $region29: #{mlp_policy.1} parent=5 // pred_check
        %p186 = pneg %p185
      $region30: #{mlp_policy.1} parent=5 // pred_check_branch
        %188 = sbr.rel (%p186) target = $region32
      $region31: #{mlp_policy.1} parent=5 // pred_region
        // Predicated region
        $region33: #{mlp_policy.1} parent=31 // pred_check
          %p189 = pneg %p32
        $region34: #{mlp_policy.1} parent=31 // pred_check_branch
          %191 = sbr.rel (%p189) target = $region36
        $region35: #{mlp_policy.1} parent=31 // pred_region
          %s192 = smul.u32 4, %s12
          %p193 = scmp.lt.s32.totalorder %s192, 7
          %s194 = scalar_select %p193, %s192, 7
          %s195 = smul.addr %s194, 8
          %s196 = scalar_lea.vmem %s0, %s195
          %s197 = smul.u32 4, %s12
        $region36: #{mlp_policy.1} parent=31 // pred_fallthru
          _
      $region32: #{mlp_policy.1} parent=5 // pred_fallthru
        _
      %p198 = scmp.le.s32.totalorder 1, %s12
      %p199 = scmp.lt.s32.totalorder %s12, 3
      %p200 = pnand %p198, %p199
      %p201 = pneg %p200
      // Predicated region
      $region37: #{mlp_policy.1} parent=5 // pred_check
        _
      $region38: #{mlp_policy.1} parent=5 // pred_check_branch
        %203 = sbr.rel (%p200) target = $region40
      $region39: #{mlp_policy.1} parent=5 // pred_region
        %s204 = ssub.s32 %s12, 1
        // Predicated region
        $region41: #{mlp_policy.1} parent=39 // pred_check
          %p205 = pneg %p101
        $region42: #{mlp_policy.1} parent=39 // pred_check_branch
          %207 = sbr.rel (%p205) target = $region44
        $region43: #{mlp_policy.1} parent=39 // pred_region
          %208 = dma.done [#allocation3], 2048
        $region44: #{mlp_policy.1} parent=39 // pred_fallthru
          _
        %s209 = smul.u32 4, %s17
        %p210 = scmp.lt.s32.totalorder %s209, 7
        %s211 = scalar_select %p210, %s209, 7
        %s212 = smul.addr %s211, 8
        %s213 = scalar_lea.vmem %s0, %s212
        %p214 = pneg %p38
        %p215 = pneg %p35
        %p216 = pneg %p59
        %p217 = pneg %p56
        %p218 = pneg %p80
        %p219 = pneg %p77
        %p220 = pneg %p101
        %p221 = pneg %p98
        %p222 = pneg %p122
        %p223 = pneg %p119
        %p224 = pneg %p148
        %p225 = pneg %p145
        %s226 = smul.u32 4, %s17
        %p227 = scmp.lt.s32.totalorder %s226, 7
        %s228 = scalar_select %p227, %s226, 7
        %s229 = smul.addr %s228, 8
        %s230 = scalar_lea.vmem %s5, %s229
        %s231 = smul.u32 4, %s17
        %p232 = scmp.lt.s32.totalorder %s231, 7
        %s233 = scalar_select %p232, %s231, 7
        %s234 = smul.addr %s233, 8
        %s235 = scalar_lea.vmem %s0, %s234
        %s236 = smul.u32 4, %s17
        %s237 = smul.u32 4, %s17
        %p238 = scmp.lt.s32.totalorder %s237, 7
        %s239 = scalar_select %p238, %s237, 7
        %s240 = smul.addr %s239, 8
        %s241 = scalar_lea.vmem %s5, %s240
        %s242 = smul.u32 4, %s17
        %v243 = vld [vmem:[%s235] sm:$0xff]
        %v244 = vld [vmem:[%s235 + $0x8] sm:$0xff]
        %v245 = vld [vmem:[%s235 + $0x10] sm:$0xff]
        %v246 = vld [vmem:[%s235 + $0x18] sm:$0xff]
        %v247 = vld [vmem:[%s1] sm:$0xff]
        %v248 = vld [vmem:[%s1 + $0x8] sm:$0xff]
        %v249 = vld [vmem:[%s1 + $0x10] sm:$0xff]
        %v250 = vld [vmem:[%s1 + $0x18] sm:$0xff]
        %v251 = vld [vmem:[%s2] sm:$0x1]
        %v253 = vlaneseq
        %v254 = vshrl.u32 %v253, 7
        %v255 = vsub.s32 0, %v254
        %v256 = vrot.slane %v251, %v255
        %vm258 = vcmask 261120
        %v260 = vsel %vm258, %v243, 0
        %v263 = vsel %vm258, %v244, 0
        %v266 = vsel %vm258, %v245, 0
        %v269 = vsel %vm258, %v246, 0
        %271 = vmatprep.subr.mxu0 0.0
        %272 = vmatpush1.msra.mxu0 0.0
        %273 = vmatprep.subr.mxu0 0.0
        %274 = vmatpush1.msra.mxu0 0.0
        %275 = vmatprep.subr.mxu0 0.0
        %276 = vmatpush1.msra.mxu0 0.0
        %277 = vmatprep.subr.mxu0 0.0
        %278 = vmatpush1.msra.mxu0 0.0
        %279 = vmatprep.subr.mxu0 0.0
        %280 = vmatpush1.msra.mxu0 0.0
        %281 = vmatprep.subr.mxu0 0.0
        %282 = vmatpush1.msra.mxu0 0.0
        %283 = vmatprep.subr.mxu0 0.0
        %284 = vmatpush1.msra.mxu0 0.0
        %285 = vmatprep.subr.mxu0 0.0
        %286 = vmatpush1.msra.mxu0 0.0
        %287 = vmatprep.subr.mxu0 0.0
        %288 = vmatpush1.msra.mxu0 0.0
        %289 = vmatprep.subr.mxu0 0.0
        %290 = vmatpush1.msra.mxu0 0.0
        %291 = vmatprep.subr.mxu0 0.0
        %292 = vmatpush1.msra.mxu0 0.0
        %293 = vmatprep.subr.mxu0 0.0
        %294 = vmatpush1.msra.mxu0 0.0
        %295 = vmatprep.subr.mxu0 0.0
        %296 = vmatpush1.msra.mxu0 %v250
        %297 = vmatprep.subr.mxu0 0.0
        %298 = vmatpush1.msra.mxu0 %v249
        %299 = vmatprep.subr.mxu0 0.0
        %300 = vmatpush1.msra.mxu0 %v248
        %301 = vmatprep.subr.mxu0 0.0
        %302 = vmatpush1.msra.mxu0 %v247
        %303 = vmatprep.subr.mxu0 0.0
        %304 = vmatpush2.msra.mxu0 0.0
        %305 = vmatprep.subr.mxu0 0.0
        %306 = vmatpush2.msra.mxu0 0.0
        %307 = vmatprep.subr.mxu0 0.0
        %308 = vmatpush2.msra.mxu0 0.0
        %309 = vmatprep.subr.mxu0 0.0
        %310 = vmatpush2.msra.mxu0 0.0
        %311 = vmatprep.subr.mxu0 0.0
        %312 = vmatpush2.msra.mxu0 0.0
        %313 = vmatprep.subr.mxu0 0.0
        %314 = vmatpush2.msra.mxu0 0.0
        %315 = vmatprep.subr.mxu0 0.0
        %316 = vmatpush2.msra.mxu0 0.0
        %317 = vmatprep.subr.mxu0 0.0
        %318 = vmatpush2.msra.mxu0 0.0
        %319 = vmatprep.subr.mxu0 0.0
        %320 = vmatpush2.msra.mxu0 0.0
        %321 = vmatprep.subr.mxu0 0.0
        %322 = vmatpush2.msra.mxu0 0.0
        %323 = vmatprep.subr.mxu0 0.0
        %324 = vmatpush2.msra.mxu0 0.0
        %325 = vmatprep.subr.mxu0 0.0
        %326 = vmatpush2.msra.mxu0 0.0
        %327 = vmatprep.subr.mxu0 0.0
        %328 = vmatpush2.msra.mxu0 0.0
        %329 = vmatprep.subr.mxu0 0.0
        %330 = vmatpush2.msra.mxu0 0.0
        %331 = vmatprep.subr.mxu0 0.0
        %332 = vmatpush2.msra.mxu0 0.0
        %333 = vmatprep.subr.mxu0 0.0
        %334 = vmatpush2.msra.mxu0 0.0
        %335 = vmatprep.mubr.f32.mxu0 0.0
        %336 = vmatmul.mubr.f32.gmra.mxu0 %v260
        %v337 = vpop.f32.mrf.mxu0
        %v338 = vadd.f32 %v256, %v337
        %v339 = vpop.f32.mrf.mxu0
        %340 = vmatprep.mubr.f32.mxu0 0.0
        %341 = vmatmul.mubr.f32.gmra.mxu0 %v263
        %v342 = vpop.f32.mrf.mxu0
        %v343 = vadd.f32 %v256, %v342
        %v344 = vpop.f32.mrf.mxu0
        %345 = vmatprep.mubr.f32.mxu0 0.0
        %346 = vmatmul.mubr.f32.gmra.mxu0 %v266
        %v347 = vpop.f32.mrf.mxu0
        %v348 = vadd.f32 %v256, %v347
        %v349 = vpop.f32.mrf.mxu0
        %350 = vmatprep.mubr.f32.mxu0 0.0
        %351 = vmatmul.mubr.f32.gmra.mxu0 %v269
        %v352 = vpop.f32.mrf.mxu0
        %v353 = vadd.f32 %v256, %v352
        %v354 = vpop.f32.mrf.mxu0
        %355 = vdwg.mxu0
        %v356 = vtanh.pop %v338
        %v357 = vtanh.pop %v343
        %v358 = vtanh.pop %v348
        %v359 = vtanh.pop %v353
        %v360 = vld [vmem:[#allocation2] sm:$0xff]
        %v361 = vld [vmem:[#allocation2 + $0x8] sm:$0xff]
        %v362 = vld [vmem:[#allocation2 + $0x10] sm:$0xff]
        %v363 = vld [vmem:[#allocation2 + $0x18] sm:$0xff]
        %v364 = vld [vmem:[#allocation2 + $0x20] sm:$0xff]
        %v365 = vld [vmem:[#allocation2 + $0x28] sm:$0xff]
        %v366 = vld [vmem:[#allocation2 + $0x30] sm:$0xff]
        %v367 = vld [vmem:[#allocation2 + $0x38] sm:$0xff]
        %v368 = vld [vmem:[#allocation2 + $0x40] sm:$0xff]
        %v369 = vld [vmem:[#allocation2 + $0x48] sm:$0xff]
        %v370 = vld [vmem:[#allocation2 + $0x50] sm:$0xff]
        %v371 = vld [vmem:[#allocation2 + $0x58] sm:$0xff]
        %v372 = vld [vmem:[#allocation2 + $0x60] sm:$0xff]
        %v373 = vld [vmem:[#allocation2 + $0x68] sm:$0xff]
        %v374 = vld [vmem:[#allocation2 + $0x70] sm:$0xff]
        %v375 = vld [vmem:[#allocation2 + $0x78] sm:$0xff]
        %v376 = vld [vmem:[%s4] sm:$0x1]
        %v378 = vlaneseq
        %v379 = vshrl.u32 %v378, 7
        %v380 = vsub.s32 0, %v379
        %v381 = vrot.slane %v376, %v380
        %383 = vmatprep.subr.mxu0 0.0
        %384 = vmatpush1.msra.mxu0 %v375
        %385 = vmatprep.subr.mxu0 0.0
        %386 = vmatpush1.msra.mxu0 %v374
        %387 = vmatprep.subr.mxu0 0.0
        %388 = vmatpush1.msra.mxu0 %v373
        %389 = vmatprep.subr.mxu0 0.0
        %390 = vmatpush1.msra.mxu0 %v372
        %391 = vmatprep.subr.mxu0 0.0
        %392 = vmatpush1.msra.mxu0 %v371
        %393 = vmatprep.subr.mxu0 0.0
        %394 = vmatpush1.msra.mxu0 %v370
        %395 = vmatprep.subr.mxu0 0.0
        %396 = vmatpush1.msra.mxu0 %v369
        %397 = vmatprep.subr.mxu0 0.0
        %398 = vmatpush1.msra.mxu0 %v368
        %399 = vmatprep.subr.mxu0 0.0
        %400 = vmatpush1.msra.mxu0 %v367
        %401 = vmatprep.subr.mxu0 0.0
        %402 = vmatpush1.msra.mxu0 %v366
        %403 = vmatprep.subr.mxu0 0.0
        %404 = vmatpush1.msra.mxu0 %v365
        %405 = vmatprep.subr.mxu0 0.0
        %406 = vmatpush1.msra.mxu0 %v364
        %407 = vmatprep.subr.mxu0 0.0
        %408 = vmatpush1.msra.mxu0 %v363
        %409 = vmatprep.subr.mxu0 0.0
        %410 = vmatpush1.msra.mxu0 %v362
        %411 = vmatprep.subr.mxu0 0.0
        %412 = vmatpush1.msra.mxu0 %v361
        %413 = vmatprep.subr.mxu0 0.0
        %414 = vmatpush1.msra.mxu0 %v360
        %415 = vmatprep.subr.mxu0 0.0
        %416 = vmatpush2.msra.mxu0 0.0
        %417 = vmatprep.subr.mxu0 0.0
        %418 = vmatpush2.msra.mxu0 0.0
        %419 = vmatprep.subr.mxu0 0.0
        %420 = vmatpush2.msra.mxu0 0.0
        %421 = vmatprep.subr.mxu0 0.0
        %422 = vmatpush2.msra.mxu0 0.0
        %423 = vmatprep.subr.mxu0 0.0
        %424 = vmatpush2.msra.mxu0 0.0
        %425 = vmatprep.subr.mxu0 0.0
        %426 = vmatpush2.msra.mxu0 0.0
        %427 = vmatprep.subr.mxu0 0.0
        %428 = vmatpush2.msra.mxu0 0.0
        %429 = vmatprep.subr.mxu0 0.0
        %430 = vmatpush2.msra.mxu0 0.0
        %431 = vmatprep.subr.mxu0 0.0
        %432 = vmatpush2.msra.mxu0 0.0
        %433 = vmatprep.subr.mxu0 0.0
        %434 = vmatpush2.msra.mxu0 0.0
        %435 = vmatprep.subr.mxu0 0.0
        %436 = vmatpush2.msra.mxu0 0.0
        %437 = vmatprep.subr.mxu0 0.0
        %438 = vmatpush2.msra.mxu0 0.0
        %439 = vmatprep.subr.mxu0 0.0
        %440 = vmatpush2.msra.mxu0 0.0
        %441 = vmatprep.subr.mxu0 0.0
        %442 = vmatpush2.msra.mxu0 0.0
        %443 = vmatprep.subr.mxu0 0.0
        %444 = vmatpush2.msra.mxu0 0.0
        %445 = vmatprep.subr.mxu0 0.0
        %446 = vmatpush2.msra.mxu0 0.0
        %447 = vmatprep.mubr.f32.mxu0 0.0
        %448 = vmatmul.mubr.f32.gmra.mxu0 %v356
        %v449 = vpop.f32.mrf.mxu0
        %v450 = vadd.f32 %v381, %v449
        %v451 = vpop.f32.mrf.mxu0
        %452 = vmatprep.mubr.f32.mxu0 0.0
        %453 = vmatmul.mubr.f32.gmra.mxu0 %v357
        %v454 = vpop.f32.mrf.mxu0
        %v455 = vadd.f32 %v381, %v454
        %v456 = vpop.f32.mrf.mxu0
        %457 = vmatprep.mubr.f32.mxu0 0.0
        %458 = vmatmul.mubr.f32.gmra.mxu0 %v358
        %v459 = vpop.f32.mrf.mxu0
        %v460 = vadd.f32 %v381, %v459
        %v461 = vpop.f32.mrf.mxu0
        %462 = vmatprep.mubr.f32.mxu0 0.0
        %463 = vmatmul.mubr.f32.gmra.mxu0 %v359
        %v464 = vpop.f32.mrf.mxu0
        %v465 = vadd.f32 %v381, %v464
        %v466 = vpop.f32.mrf.mxu0
        %467 = vdwg.mxu0
        %468 = vmax.xlane.f32.xlu0 %v450
        %v469 = vpop.xlane.xlu0 %468
        %470 = vmax.xlane.f32.xlu0 %v455
        %v471 = vpop.xlane.xlu0 %470
        %472 = vmax.xlane.f32.xlu0 %v460
        %v473 = vpop.xlane.xlu0 %472
        %474 = vmax.xlane.f32.xlu0 %v465
        %v475 = vpop.xlane.xlu0 %474
        %v476 = vsub.f32 %v450, %v469
        %v477 = vsub.f32 %v455, %v471
        %v478 = vsub.f32 %v460, %v473
        %v479 = vsub.f32 %v465, %v475
        %v480 = vmul.f32 %v476, 1.442695
        %v481 = vpow.pop %v480
        %v482 = vmul.f32 %v477, 1.442695
        %v483 = vpow.pop %v482
        %v484 = vmul.f32 %v478, 1.442695
        %v485 = vpow.pop %v484
        %v486 = vmul.f32 %v479, 1.442695
        %v487 = vpow.pop %v486
        %488 = vadd.xlane.f32.xlu0 %v481
        %v489 = vpop.xlane.xlu0 %488
        %490 = vadd.xlane.f32.xlu0 %v483
        %v491 = vpop.xlane.xlu0 %490
        %492 = vadd.xlane.f32.xlu0 %v485
        %v493 = vpop.xlane.xlu0 %492
        %494 = vadd.xlane.f32.xlu0 %v487
        %v495 = vpop.xlane.xlu0 %494
        %v496 = vrcp.pop %v489
        %v497 = vmul.f32 %v481, %v496
        %v498 = vrcp.pop %v491
        %v499 = vmul.f32 %v483, %v498
        %v500 = vrcp.pop %v493
        %v501 = vmul.f32 %v485, %v500
        %v502 = vrcp.pop %v495
        %v503 = vmul.f32 %v487, %v502
        %vm504 = vcmask 64512
        %505 = vst.msk [vmem:[%s241] sm:$0xff] %vm504, %v497
        %506 = vst.msk [vmem:[%s241 + $0x8] sm:$0xff] %vm504, %v499
        %507 = vst.msk [vmem:[%s241 + $0x10] sm:$0xff] %vm504, %v501
        %508 = vst.msk [vmem:[%s241 + $0x18] sm:$0xff] %vm504, %v503
        %s509 = smul.u32 4, %s17
        %p510 = scmp.lt.s32.totalorder %s509, 7
        %s511 = scalar_select %p510, %s509, 7
        %s512 = smul.addr %s511, 8
        %s513 = scalar_lea.vmem %s5, %s512
        // Predicated region
        $region45: #{mlp_policy.1} parent=39 // pred_check
          %p514 = pneg %p145
        $region46: #{mlp_policy.1} parent=39 // pred_check_branch
          %516 = sbr.rel (%p514) target = $region48
        $region47: #{mlp_policy.1} parent=39 // pred_region
          %s517 = smul.u32 4, %s17
        $region48: #{mlp_policy.1} parent=39 // pred_fallthru
          _
      $region40: #{mlp_policy.1} parent=5 // pred_fallthru
        _
      %p518 = scmp.le.s32.totalorder 2, %s12
      // Predicated region
      $region49: #{mlp_policy.1} parent=5 // pred_check
        %p519 = pneg %p518
      $region50: #{mlp_policy.1} parent=5 // pred_check_branch
        %521 = sbr.rel (%p519) target = $region52
      $region51: #{mlp_policy.1} parent=5 // pred_region
        %s522 = ssub.s32 %s12, 2
        // Predicated region
        $region53: #{mlp_policy.1} parent=51 // pred_check
          %p523 = pneg %p151
        $region54: #{mlp_policy.1} parent=51 // pred_check_branch
          %525 = sbr.rel (%p523) target = $region56
        $region55: #{mlp_policy.1} parent=51 // pred_region
          %s526 = smul.u32 4, %s18
          %p527 = scmp.lt.s32.totalorder %s526, 7
          %s528 = scalar_select %p527, %s526, 7
          %s529 = smul.addr %s528, 8
          %s530 = scalar_lea.vmem %s5, %s529
        $region56: #{mlp_policy.1} parent=51 // pred_fallthru
          _
      $region52: #{mlp_policy.1} parent=5 // pred_fallthru
        _
    $region6: #{mlp_policy.1} parent=1 // loop_footer
      %s16 = sadd.s32 1, %s12
    $region7: #{mlp_policy.1} parent=1 // loop_footer_branch
      %11 = sbr.rel target = $region3
    $region8: #{mlp_policy.1} parent=1 // loop_exit
      _
    %531 = vsyncpa [#allocation3], 1
    %s532 = scalar_lea.sflag [#allocation3], 1
    %533 = vsyncpa %s532, 1

</llo_original>
